<compile_context>
chip_gen: v5e
topology: v5e:2x2
jax: 0.10.0
libtpu: 0.0.40
codegen_flags: <defaults>
</compile_context>

<pallas_src>
import numpy as np
import jax
import jax.numpy as jnp
from jax.experimental import pallas as pl
from jax.experimental.pallas import tpu as pltpu

C_IN, C1, C2 = 4, 8, 8
CO = C1 + C2
H = W = 16
HW = H * W
KH = KW = 3
TAPS = KH * KW * C_IN          # 36 : fused (tap, in-channel) contraction axis
H2, W2 = H - 2, W - 2          # model2 "valid" conv output spatial: 14 x 14
NB = 8                         # samples processed per grid step


def _ensemble_kernel(xs_ref, wf_ref, bf_ref, mt_ref, o_ref, f2_ref):
    # Fused conv for BOTH models as one MXU matmul:
    #   (C1+C2, 36) @ (36, NB*256) -> (16, NB*256)
    f = jnp.dot(wf_ref[...], xs_ref[...], preferred_element_type=jnp.float32)
    f = jnp.maximum(f + bf_ref[...], 0.0)          # fused bias + ReLU (VPU)

    # model1 channels (rows 0..C1) are final; the torch.cat along channels is
    # simply the output row layout.
    o_ref[0:C1, :] = f[0:C1, :]

    # Restack model2 channels so the batch sits on sublanes: (NB*C2, 256).
    # These are aligned (8-sublane / 256-lane) block copies — no lane shuffles.
    for s in range(NB):
        f2_ref[s * C2:(s + 1) * C2, :] = f[C1:CO, s * HW:(s + 1) * HW]

    # Bilinear 14x14 -> 16x16 resize (align_corners=False).  The selection of
    # the valid-conv interior is folded into mt (border rows are zero), so one
    # well-shaped MXU matmul handles all NB samples: (NB*C2, 256) @ (256, 256).
    up = jnp.dot(f2_ref[...], mt_ref[...], preferred_element_type=jnp.float32)
    for s in range(NB):
        o_ref[C1:CO, s * HW:(s + 1) * HW] = up[s * C2:(s + 1) * C2, :]


def _interp_matrix(out_size, in_size):
    """Row matrix for 1-D bilinear resize, PyTorch align_corners=False."""
    m = np.zeros((out_size, in_size), np.float32)
    if in_size == out_size:
        np.fill_diagonal(m, 1.0)
        return m
    scale = in_size / out_size
    for o in range(out_size):
        src = max((o + 0.5) * scale - 0.5, 0.0)
        i0 = min(int(np.floor(src)), in_size - 1)
        i1 = min(i0 + 1, in_size - 1)
        frac = src - i0
        m[o, i0] += 1.0 - frac
        m[o, i1] += frac
    return m


def _build_resize_matrix():
    """(256, 256) matrix: rows are full-grid (pad=1 conv) positions; border
    rows are zero, interior rows carry kron(R, C).T so that
    up2_flat = relu(conv_pad1)_flat @ MT256 equals the bilinear upsample of the
    valid-conv output."""
    R = _interp_matrix(H, H2)                       # (16, 14)
    Cw = _interp_matrix(W, W2)                      # (16, 14)
    m196t = np.kron(R, Cw).T.astype(np.float32)     # (196, 256)
    mt256 = np.zeros((HW, HW), np.float32)
    for y in range(H2):
        for x in range(W2):
            mt256[(y + 1) * W + (x + 1), :] = m196t[y * W2 + x, :]
    return mt256


def feature_ensemble_2models(x, wf, bf, mt256):
    """x: (N, C_IN, H, W) float32 NCHW.  Returns (N, C1+C2, H, W)."""
    n = x.shape[0]
    n_pad = ((n + NB - 1) // NB) * NB
    if n_pad != n:
        x = jnp.pad(x, ((0, n_pad - n), (0, 0), (0, 0), (0, 0)))

    # im2col for the pad=1 conv only (model2 is recovered from its interior):
    # taps*(in-channels) on sublanes, (sample, flat-spatial) on lanes.
    # TODO(synk): taps could be built in-kernel from padded x to cut the 9x
    # im2col HBM expansion; kept host-side here for simplicity.
    xp = jnp.pad(x, ((0, 0), (0, 0), (1, 1), (1, 1)))
    taps = [xp[:, :, ky:ky + H, kx:kx + W]
            for ky in range(KH) for kx in range(KW)]
    xs = jnp.stack(taps, axis=1).reshape(n_pad, TAPS, HW)
    xs = jnp.transpose(xs, (1, 0, 2)).reshape(TAPS, n_pad * HW)

    out = pl.pallas_call(
        _ensemble_kernel,
        out_shape=jax.ShapeDtypeStruct((CO, n_pad * HW), jnp.float32),
        grid_spec=pltpu.PrefetchScalarGridSpec(
            num_scalar_prefetch=0,
            grid=(n_pad // NB,),
            in_specs=[
                pl.BlockSpec((TAPS, NB * HW), lambda i: (0, i)),   # im2col
                pl.BlockSpec((CO, TAPS), lambda i: (0, 0)),        # fused W
                pl.BlockSpec((CO, 1), lambda i: (0, 0)),           # fused bias
                pl.BlockSpec((HW, HW), lambda i: (0, 0)),          # resize mat
            ],
            out_specs=pl.BlockSpec((CO, NB * HW), lambda i: (0, i)),
            scratch_shapes=[pltpu.VMEM((NB * C2, HW), jnp.float32)],
        ),
        compiler_params=pltpu.CompilerParams(
            dimension_semantics=("parallel",)),
    )(xs, wf, bf, mt256)

    out = out.reshape(CO, n_pad, H, W)
    return jnp.transpose(out, (1, 0, 2, 3))[:n]


def _reference(x, w1_oihw, b1v, w2_oihw, b2v):
    """Independent reference: lax convs + jax.image.resize (bilinear,
    half-pixel centers == PyTorch align_corners=False for this upsample)."""
    n = x.shape[0]
    dn = jax.lax.conv_dimension_numbers(x.shape, w1_oihw.shape,
                                        ("NCHW", "OIHW", "NCHW"))
    f1 = jax.lax.conv_general_dilated(
        x, w1_oihw, (1, 1), ((1, 1), (1, 1)), dimension_numbers=dn,
        precision=jax.lax.Precision.HIGHEST)
    f1 = jnp.maximum(f1 + b1v[None, :, None, None], 0.0)
    f2 = jax.lax.conv_general_dilated(
        x, w2_oihw, (1, 1), "VALID", dimension_numbers=dn,
        precision=jax.lax.Precision.HIGHEST)
    f2 = jnp.maximum(f2 + b2v[None, :, None, None], 0.0)
    up2 = jax.image.resize(f2, (n, C2, H, W), method="bilinear")
    return jnp.concatenate([f1, up2], axis=1)


if __name__ == "__main__":
    key = jax.random.PRNGKey(0)
    kx, k1, k2, k3, k4 = jax.random.split(key, 5)

    N = 16
    x = jax.random.normal(kx, (N, C_IN, H, W), jnp.float32)

    # deterministic synthetic "trimmed model" parameters (PyTorch OIHW convs)
    w1_oihw = jax.random.normal(k1, (C1, C_IN, KH, KW), jnp.float32) * 0.1
    b1v = jax.random.normal(k2, (C1,), jnp.float32) * 0.1
    w2_oihw = jax.random.normal(k3, (C2, C_IN, KH, KW), jnp.float32) * 0.1
    b2v = jax.random.normal(k4, (C2,), jnp.float32) * 0.1

    # fused kernel-side weights: rows 0..7 = model1, rows 8..15 = model2,
    # contraction axis ordered (ky, kx, cin) to match the im2col.
    wf = jnp.concatenate([
        jnp.transpose(w1_oihw, (0, 2, 3, 1)).reshape(C1, TAPS),
        jnp.transpose(w2_oihw, (0, 2, 3, 1)).reshape(C2, TAPS)], axis=0)
    bf = jnp.concatenate([b1v, b2v]).reshape(CO, 1)
    mt256 = jnp.asarray(_build_resize_matrix())

    out = feature_ensemble_2models(x, wf, bf, mt256)
    out = jax.block_until_ready(out)

    ref = jax.block_until_ready(_reference(x, w1_oihw, b1v, w2_oihw, b2v))
    assert out.shape == (N, CO, H, W), out.shape
    err = float(np.max(np.abs(np.asarray(out) - np.asarray(ref))))
    assert np.allclose(np.asarray(out), np.asarray(ref), atol=1e-2, rtol=1e-2), (
        "max abs err %.3e" % err)

    print("KERNEL_OK")
</pallas_src>

<mosaic_0001>
module attributes {stable_mosaic.version = 11 : i64} {
  func.func @_ensemble_kernel(%arg0: i32, %arg1: memref<36x2048xf32, #tpu.memory_space<vmem>>, %arg2: memref<16x36xf32, #tpu.memory_space<vmem>>, %arg3: memref<16x1xf32, #tpu.memory_space<vmem>>, %arg4: memref<256x256xf32, #tpu.memory_space<vmem>>, %arg5: memref<16x2048xf32, #tpu.memory_space<vmem>>, %arg6: memref<64x256xf32, #tpu.memory_space<vmem>>) attributes {dimension_semantics = [#tpu.dimension_semantics<parallel>], iteration_bounds = array<i64: 2>, scalar_prefetch = 0 : i64, scratch_operands = 1 : i64, tpu.core_type = #tpu.core_type<tc>, window_params = [{transform_indices = @transform_0, window_bounds = array<i64: 36, 2048>}, {pipeline_mode = #tpu.pipeline_mode<synchronous>, transform_indices = @transform_1, window_bounds = array<i64: 16, 36>}, {pipeline_mode = #tpu.pipeline_mode<synchronous>, transform_indices = @transform_2, window_bounds = array<i64: 16, 1>}, {pipeline_mode = #tpu.pipeline_mode<synchronous>, transform_indices = @transform_3, window_bounds = array<i64: 256, 256>}, {transform_indices = @transform_4, window_bounds = array<i64: 16, 2048>}]} {
    %c0 = arith.constant 0 : index
    %c0_0 = arith.constant 0 : index
    %0 = vector.load %arg2[%c0, %c0_0] : memref<16x36xf32, #tpu.memory_space<vmem>>, vector<16x36xf32>
    %c0_1 = arith.constant 0 : index
    %c0_2 = arith.constant 0 : index
    %1 = vector.load %arg1[%c0_1, %c0_2] : memref<36x2048xf32, #tpu.memory_space<vmem>>, vector<36x2048xf32>
    %cst = arith.constant dense<0.000000e+00> : vector<16x2048xf32>
    %2 = tpu.matmul %0, %1, %cst {dimension_numbers = #tpu.dot_dimension_numbers<[1], [0], [0], [1], [0, 0, 1, 1], [], []>} : vector<16x36xf32>, vector<36x2048xf32>, vector<16x2048xf32> -> vector<16x2048xf32>
    %c0_3 = arith.constant 0 : index
    %c0_4 = arith.constant 0 : index
    %3 = vector.load %arg3[%c0_3, %c0_4] : memref<16x1xf32, #tpu.memory_space<vmem>>, vector<16x1xf32>
    %4 = vector.broadcast %3 : vector<16x1xf32> to vector<16x2048xf32>
    %5 = arith.addf %2, %4 : vector<16x2048xf32>
    %cst_5 = arith.constant 0.000000e+00 : f32
    %6 = vector.broadcast %cst_5 : f32 to vector<16x2048xf32>
    %7 = arith.maximumf %5, %6 : vector<16x2048xf32>
    %8 = vector.extract_strided_slice %7 {offsets = [0, 0], sizes = [8, 2048], strides = [1, 1]} : vector<16x2048xf32> to vector<8x2048xf32>
    %c0_6 = arith.constant 0 : index
    %c0_7 = arith.constant 0 : index
    %9 = vector.load %arg5[%c0_6, %c0_7] : memref<16x2048xf32, #tpu.memory_space<vmem>>, vector<8x2048xf32>
    tpu.vector_store %arg5[%c0_6, %c0_7], %8 {strides = array<i32>} : memref<16x2048xf32, #tpu.memory_space<vmem>>, vector<8x2048xf32>,
    %10 = vector.extract_strided_slice %7 {offsets = [8, 0], sizes = [8, 256], strides = [1, 1]} : vector<16x2048xf32> to vector<8x256xf32>
    %c0_8 = arith.constant 0 : index
    %c0_9 = arith.constant 0 : index
    %11 = vector.load %arg6[%c0_8, %c0_9] : memref<64x256xf32, #tpu.memory_space<vmem>>, vector<8x256xf32>
    tpu.vector_store %arg6[%c0_8, %c0_9], %10 {strides = array<i32>} : memref<64x256xf32, #tpu.memory_space<vmem>>, vector<8x256xf32>,
    %12 = vector.extract_strided_slice %7 {offsets = [8, 256], sizes = [8, 256], strides = [1, 1]} : vector<16x2048xf32> to vector<8x256xf32>
    %c8 = arith.constant 8 : index
    %c0_10 = arith.constant 0 : index
    %13 = vector.load %arg6[%c8, %c0_10] : memref<64x256xf32, #tpu.memory_space<vmem>>, vector<8x256xf32>
    tpu.vector_store %arg6[%c8, %c0_10], %12 {strides = array<i32>} : memref<64x256xf32, #tpu.memory_space<vmem>>, vector<8x256xf32>,
    %14 = vector.extract_strided_slice %7 {offsets = [8, 512], sizes = [8, 256], strides = [1, 1]} : vector<16x2048xf32> to vector<8x256xf32>
    %c16 = arith.constant 16 : index
    %c0_11 = arith.constant 0 : index
    %15 = vector.load %arg6[%c16, %c0_11] : memref<64x256xf32, #tpu.memory_space<vmem>>, vector<8x256xf32>
    tpu.vector_store %arg6[%c16, %c0_11], %14 {strides = array<i32>} : memref<64x256xf32, #tpu.memory_space<vmem>>, vector<8x256xf32>,
    %16 = vector.extract_strided_slice %7 {offsets = [8, 768], sizes = [8, 256], strides = [1, 1]} : vector<16x2048xf32> to vector<8x256xf32>
    %c24 = arith.constant 24 : index
    %c0_12 = arith.constant 0 : index
    %17 = vector.load %arg6[%c24, %c0_12] : memref<64x256xf32, #tpu.memory_space<vmem>>, vector<8x256xf32>
    tpu.vector_store %arg6[%c24, %c0_12], %16 {strides = array<i32>} : memref<64x256xf32, #tpu.memory_space<vmem>>, vector<8x256xf32>,
    %18 = vector.extract_strided_slice %7 {offsets = [8, 1024], sizes = [8, 256], strides = [1, 1]} : vector<16x2048xf32> to vector<8x256xf32>
    %c32 = arith.constant 32 : index
    %c0_13 = arith.constant 0 : index
    %19 = vector.load %arg6[%c32, %c0_13] : memref<64x256xf32, #tpu.memory_space<vmem>>, vector<8x256xf32>
    tpu.vector_store %arg6[%c32, %c0_13], %18 {strides = array<i32>} : memref<64x256xf32, #tpu.memory_space<vmem>>, vector<8x256xf32>,
    %20 = vector.extract_strided_slice %7 {offsets = [8, 1280], sizes = [8, 256], strides = [1, 1]} : vector<16x2048xf32> to vector<8x256xf32>
    %c40 = arith.constant 40 : index
    %c0_14 = arith.constant 0 : index
    %21 = vector.load %arg6[%c40, %c0_14] : memref<64x256xf32, #tpu.memory_space<vmem>>, vector<8x256xf32>
    tpu.vector_store %arg6[%c40, %c0_14], %20 {strides = array<i32>} : memref<64x256xf32, #tpu.memory_space<vmem>>, vector<8x256xf32>,
    %22 = vector.extract_strided_slice %7 {offsets = [8, 1536], sizes = [8, 256], strides = [1, 1]} : vector<16x2048xf32> to vector<8x256xf32>
    %c48 = arith.constant 48 : index
    %c0_15 = arith.constant 0 : index
    %23 = vector.load %arg6[%c48, %c0_15] : memref<64x256xf32, #tpu.memory_space<vmem>>, vector<8x256xf32>
    tpu.vector_store %arg6[%c48, %c0_15], %22 {strides = array<i32>} : memref<64x256xf32, #tpu.memory_space<vmem>>, vector<8x256xf32>,
    %24 = vector.extract_strided_slice %7 {offsets = [8, 1792], sizes = [8, 256], strides = [1, 1]} : vector<16x2048xf32> to vector<8x256xf32>
    %c56 = arith.constant 56 : index
    %c0_16 = arith.constant 0 : index
    %25 = vector.load %arg6[%c56, %c0_16] : memref<64x256xf32, #tpu.memory_space<vmem>>, vector<8x256xf32>
    tpu.vector_store %arg6[%c56, %c0_16], %24 {strides = array<i32>} : memref<64x256xf32, #tpu.memory_space<vmem>>, vector<8x256xf32>,
    %c0_17 = arith.constant 0 : index
    %c0_18 = arith.constant 0 : index
    %26 = vector.load %arg6[%c0_17, %c0_18] : memref<64x256xf32, #tpu.memory_space<vmem>>, vector<64x256xf32>
    %c0_19 = arith.constant 0 : index
    %c0_20 = arith.constant 0 : index
    %27 = vector.load %arg4[%c0_19, %c0_20] : memref<256x256xf32, #tpu.memory_space<vmem>>, vector<256x256xf32>
    %cst_21 = arith.constant dense<0.000000e+00> : vector<64x256xf32>
    %28 = tpu.matmul %26, %27, %cst_21 {dimension_numbers = #tpu.dot_dimension_numbers<[1], [0], [0], [1], [0, 0, 1, 1], [], []>} : vector<64x256xf32>, vector<256x256xf32>, vector<64x256xf32> -> vector<64x256xf32>
    %29 = vector.extract_strided_slice %28 {offsets = [0, 0], sizes = [8, 256], strides = [1, 1]} : vector<64x256xf32> to vector<8x256xf32>
    %c8_22 = arith.constant 8 : index
    %c0_23 = arith.constant 0 : index
    %30 = vector.load %arg5[%c8_22, %c0_23] : memref<16x2048xf32, #tpu.memory_space<vmem>>, vector<8x256xf32>
    tpu.vector_store %arg5[%c8_22, %c0_23], %29 {strides = array<i32>} : memref<16x2048xf32, #tpu.memory_space<vmem>>, vector<8x256xf32>,
    %31 = vector.extract_strided_slice %28 {offsets = [8, 0], sizes = [8, 256], strides = [1, 1]} : vector<64x256xf32> to vector<8x256xf32>
    %c8_24 = arith.constant 8 : index
    %c256 = arith.constant 256 : index
    %32 = vector.load %arg5[%c8_24, %c256] : memref<16x2048xf32, #tpu.memory_space<vmem>>, vector<8x256xf32>
    tpu.vector_store %arg5[%c8_24, %c256], %31 {strides = array<i32>} : memref<16x2048xf32, #tpu.memory_space<vmem>>, vector<8x256xf32>,
    %33 = vector.extract_strided_slice %28 {offsets = [16, 0], sizes = [8, 256], strides = [1, 1]} : vector<64x256xf32> to vector<8x256xf32>
    %c8_25 = arith.constant 8 : index
    %c512 = arith.constant 512 : index
    %34 = vector.load %arg5[%c8_25, %c512] : memref<16x2048xf32, #tpu.memory_space<vmem>>, vector<8x256xf32>
    tpu.vector_store %arg5[%c8_25, %c512], %33 {strides = array<i32>} : memref<16x2048xf32, #tpu.memory_space<vmem>>, vector<8x256xf32>,
    %35 = vector.extract_strided_slice %28 {offsets = [24, 0], sizes = [8, 256], strides = [1, 1]} : vector<64x256xf32> to vector<8x256xf32>
    %c8_26 = arith.constant 8 : index
    %c768 = arith.constant 768 : index
    %36 = vector.load %arg5[%c8_26, %c768] : memref<16x2048xf32, #tpu.memory_space<vmem>>, vector<8x256xf32>
    tpu.vector_store %arg5[%c8_26, %c768], %35 {strides = array<i32>} : memref<16x2048xf32, #tpu.memory_space<vmem>>, vector<8x256xf32>,
    %37 = vector.extract_strided_slice %28 {offsets = [32, 0], sizes = [8, 256], strides = [1, 1]} : vector<64x256xf32> to vector<8x256xf32>
    %c8_27 = arith.constant 8 : index
    %c1024 = arith.constant 1024 : index
    %38 = vector.load %arg5[%c8_27, %c1024] : memref<16x2048xf32, #tpu.memory_space<vmem>>, vector<8x256xf32>
    tpu.vector_store %arg5[%c8_27, %c1024], %37 {strides = array<i32>} : memref<16x2048xf32, #tpu.memory_space<vmem>>, vector<8x256xf32>,
    %39 = vector.extract_strided_slice %28 {offsets = [40, 0], sizes = [8, 256], strides = [1, 1]} : vector<64x256xf32> to vector<8x256xf32>
    %c8_28 = arith.constant 8 : index
    %c1280 = arith.constant 1280 : index
    %40 = vector.load %arg5[%c8_28, %c1280] : memref<16x2048xf32, #tpu.memory_space<vmem>>, vector<8x256xf32>
    tpu.vector_store %arg5[%c8_28, %c1280], %39 {strides = array<i32>} : memref<16x2048xf32, #tpu.memory_space<vmem>>, vector<8x256xf32>,
    %41 = vector.extract_strided_slice %28 {offsets = [48, 0], sizes = [8, 256], strides = [1, 1]} : vector<64x256xf32> to vector<8x256xf32>
    %c8_29 = arith.constant 8 : index
    %c1536 = arith.constant 1536 : index
    %42 = vector.load %arg5[%c8_29, %c1536] : memref<16x2048xf32, #tpu.memory_space<vmem>>, vector<8x256xf32>
    tpu.vector_store %arg5[%c8_29, %c1536], %41 {strides = array<i32>} : memref<16x2048xf32, #tpu.memory_space<vmem>>, vector<8x256xf32>,
    %43 = vector.extract_strided_slice %28 {offsets = [56, 0], sizes = [8, 256], strides = [1, 1]} : vector<64x256xf32> to vector<8x256xf32>
    %c8_30 = arith.constant 8 : index
    %c1792 = arith.constant 1792 : index
    %44 = vector.load %arg5[%c8_30, %c1792] : memref<16x2048xf32, #tpu.memory_space<vmem>>, vector<8x256xf32>
    tpu.vector_store %arg5[%c8_30, %c1792], %43 {strides = array<i32>} : memref<16x2048xf32, #tpu.memory_space<vmem>>, vector<8x256xf32>,
    return
  }
  func.func @transform_0(%arg0: i32) -> (i32, i32) {
    %c0_i32 = arith.constant 0 : i32
    %c0_i32_0 = arith.constant 0 : i32
    return %c0_i32, %arg0 : i32, i32
  }
  func.func @transform_1(%arg0: i32) -> (i32, i32) {
    %c0_i32 = arith.constant 0 : i32
    %c0_i32_0 = arith.constant 0 : i32
    %c0_i32_1 = arith.constant 0 : i32
    return %c0_i32, %c0_i32_0 : i32, i32
  }
  func.func @transform_2(%arg0: i32) -> (i32, i32) {
    %c0_i32 = arith.constant 0 : i32
    %c0_i32_0 = arith.constant 0 : i32
    %c0_i32_1 = arith.constant 0 : i32
    return %c0_i32, %c0_i32_0 : i32, i32
  }
  func.func @transform_3(%arg0: i32) -> (i32, i32) {
    %c0_i32 = arith.constant 0 : i32
    %c0_i32_0 = arith.constant 0 : i32
    %c0_i32_1 = arith.constant 0 : i32
    return %c0_i32, %c0_i32_0 : i32, i32
  }
  func.func @transform_4(%arg0: i32) -> (i32, i32) {
    %c0_i32 = arith.constant 0 : i32
    %c0_i32_0 = arith.constant 0 : i32
    return %c0_i32, %arg0 : i32, i32
  }
}

</mosaic_0001>

<llo_original>
// kernel: tpu_custom_call.1
$region0: #{tpu_custom_call.1}
  #allocation0 [shape = 'u32[]', space=smem, size = 0x4, offset = 0x4, fixed_abs, tag = 'smem constant byte address 0x4 - core index']
  #allocation1 [shape = 'u32[72,128]{1,0:T(1,128)}', space=vmem, size = 0x9000, scoped, tag = 'internal scratch']
  #allocation2 [shape = 'f32[64,256]{1,0:T(8,128)}', space=vmem, size = 0x10000, scoped, tag = 'scratch operand']
  %s0 = inlined_call_operand.hbm [shape: f32[36,4096], index: 0, kind: input, shape index: {}]
  %s1 = inlined_call_operand.vmem [shape: f32[16,36], index: 1, kind: input, shape index: {}]
  %s2 = inlined_call_operand.vmem [shape: f32[16,1], index: 2, kind: input, shape index: {}]
  %s3 = inlined_call_operand.hbm [shape: f32[256,256], index: 3, kind: input, shape index: {}]
  %s4 = inlined_call_operand.hbm [shape: f32[16,4096], index: 4, kind: output, shape index: {}]
  %s5 = sld [smem:[#allocation0]]
  $region57: #{tpu_custom_call.1} parent=0
    _
  %s7 = ssub.s32 1, %s5
  %s8 = scalar_select 0, %s7, %s5
  $region1: #{tpu_custom_call.1} parent=0
    #allocation3 [shape = 'u8[655360]{0}', space=vmem, size = 0xa0000, scoped, tag = 'input window, operand 0']
    #allocation4 [shape = 's32[2]{0}', space=sflag, size = 0x8, scoped, tag = 'scoped memory for tpu_custom_call.1']
    #allocation5 [shape = 's32[2]{0}', space=sflag, size = 0x8, scoped, tag = 'scoped memory for tpu_custom_call.1']
    #allocation6 [shape = 'u8[262144]{0}', space=vmem, size = 0x40000, scoped, tag = 'input window, operand 3, single buffered']
    #allocation7 [shape = 's32[1]{0}', space=sflag, size = 0x4, scoped, tag = 'scoped memory for tpu_custom_call.1']
    #allocation8 [shape = 'u8[262144]{0}', space=vmem, size = 0x40000, scoped, tag = 'output window, operand 0']
    %9 = vsyncpa [#allocation4], 0
    %s10 = scalar_lea.sflag [#allocation4], 1
    %11 = vsyncpa %s10, 0
    %12 = vsyncpa [#allocation7], 0
    %13 = vsyncpa [#allocation5], 0
    %s14 = scalar_lea.sflag [#allocation5], 1
    %15 = vsyncpa %s14, 0
    loop: start=0, step=1, limit=4
    $region2: #{tpu_custom_call.1} parent=1 // loop_pre_header
      _
    $region3: #{tpu_custom_call.1} parent=1 // loop_header
      %s17 = sphi 0, %s21
      %p18 = scmp.ge.s32.totalorder %s17, 4
      %s27 = sphi 0, %s29
      %s30 = sphi 0, %s27
      %s31 = sphi 0, %s30
      %s47 = sphi 0, %s31
      %s51 = sphi 0, %s51
      %s53 = sphi 0, %s51
      %s54 = sphi 0, %s53
      %s68 = sphi 0, %s54
      %s72 = sphi 0, %s72
      %s74 = sphi 0, %s72
      %s75 = sphi 0, %s74
      %s89 = sphi 0, %s75
      %s93 = sphi 0, %s93
      %s95 = sphi 0, %s93
      %s96 = sphi 0, %s95
      %s110 = sphi 0, %s96
      %s116 = sphi 0, %s118
      %s119 = sphi 0, %s116
      %s120 = sphi 0, %s119
      %s136 = sphi 0, %s120
    $region4: #{tpu_custom_call.1} parent=1 // loop_header_branch
      %20 = sbr.rel (%p18) target = $region8
    $region5: #{tpu_custom_call.1} parent=1 // loop_body
      %s22 = ssub.s32 %s17, 1
      %s23 = ssub.s32 %s17, 2
      %s24 = sadd.s32 %s17, 1
      %s25 = ssub.s32 %s17, %s24
      %p26 = scmp.eq.s32.totalorder %s25, 0
      %s28 = sadd.s32 %s27, 1
      %s29 = scalar_select %p26, %s27, %s28
      %p32 = pneg %p26
      %p33 = scmp.eq.s32.totalorder %s17, 1
      %p34 = por %p32, %p33
      %p35 = scmp.ne.s32.totalorder %s27, %s30
      %p36 = scmp.eq.s32.totalorder %s17, 0
      %p37 = por %p35, %p36
      %p38 = scmp.ne.s32.totalorder %s27, %s30
      %p39 = scmp.eq.s32.totalorder %s22, 1
      %p40 = por %p38, %p39
      %p41 = scmp.ne.s32.totalorder %s30, %s31
      %p42 = scmp.eq.s32.totalorder %s22, 0
      %p43 = por %p41, %p42
      %p44 = scmp.ne.s32.totalorder %s30, %s31
      %p45 = scmp.eq.s32.totalorder %s23, 1
      %p46 = por %p44, %p45
      %p48 = scmp.ne.s32.totalorder %s31, %s47
      %p49 = scmp.eq.s32.totalorder %s23, 0
      %p50 = por %p48, %p49
      %s52 = sadd.s32 %s51, 1
      %p55 = scmp.eq.s32.totalorder %s17, 1
      %p56 = scmp.ne.s32.totalorder %s51, %s53
      %p57 = scmp.eq.s32.totalorder %s17, 0
      %p58 = por %p56, %p57
      %p59 = scmp.ne.s32.totalorder %s51, %s53
      %p60 = scmp.eq.s32.totalorder %s22, 1
      %p61 = por %p59, %p60
      %p62 = scmp.ne.s32.totalorder %s53, %s54
      %p63 = scmp.eq.s32.totalorder %s22, 0
      %p64 = por %p62, %p63
      %p65 = scmp.ne.s32.totalorder %s53, %s54
      %p66 = scmp.eq.s32.totalorder %s23, 1
      %p67 = por %p65, %p66
      %p69 = scmp.ne.s32.totalorder %s54, %s68
      %p70 = scmp.eq.s32.totalorder %s23, 0
      %p71 = por %p69, %p70
      %s73 = sadd.s32 %s72, 1
      %p76 = scmp.eq.s32.totalorder %s17, 1
      %p77 = scmp.ne.s32.totalorder %s72, %s74
      %p78 = scmp.eq.s32.totalorder %s17, 0
      %p79 = por %p77, %p78
      %p80 = scmp.ne.s32.totalorder %s72, %s74
      %p81 = scmp.eq.s32.totalorder %s22, 1
      %p82 = por %p80, %p81
      %p83 = scmp.ne.s32.totalorder %s74, %s75
      %p84 = scmp.eq.s32.totalorder %s22, 0
      %p85 = por %p83, %p84
      %p86 = scmp.ne.s32.totalorder %s74, %s75
      %p87 = scmp.eq.s32.totalorder %s23, 1
      %p88 = por %p86, %p87
      %p90 = scmp.ne.s32.totalorder %s75, %s89
      %p91 = scmp.eq.s32.totalorder %s23, 0
      %p92 = por %p90, %p91
      %s94 = sadd.s32 %s93, 1
      %p97 = scmp.eq.s32.totalorder %s17, 1
      %p98 = scmp.ne.s32.totalorder %s93, %s95
      %p99 = scmp.eq.s32.totalorder %s17, 0
      %p100 = por %p98, %p99
      %p101 = scmp.ne.s32.totalorder %s93, %s95
      %p102 = scmp.eq.s32.totalorder %s22, 1
      %p103 = por %p101, %p102
      %p104 = scmp.ne.s32.totalorder %s95, %s96
      %p105 = scmp.eq.s32.totalorder %s22, 0
      %p106 = por %p104, %p105
      %p107 = scmp.ne.s32.totalorder %s95, %s96
      %p108 = scmp.eq.s32.totalorder %s23, 1
      %p109 = por %p107, %p108
      %p111 = scmp.ne.s32.totalorder %s96, %s110
      %p112 = scmp.eq.s32.totalorder %s23, 0
      %p113 = por %p111, %p112
      %s114 = ssub.s32 %s17, %s24
      %p115 = scmp.eq.s32.totalorder %s114, 0
      %s117 = sadd.s32 %s116, 1
      %s118 = scalar_select %p115, %s116, %s117
      %p121 = pneg %p115
      %p122 = scmp.eq.s32.totalorder %s17, 1
      %p123 = por %p121, %p122
      %p124 = scmp.ne.s32.totalorder %s116, %s119
      %p125 = scmp.eq.s32.totalorder %s17, 0
      %p126 = por %p124, %p125
      %p127 = scmp.ne.s32.totalorder %s116, %s119
      %p128 = scmp.eq.s32.totalorder %s22, 1
      %p129 = por %p127, %p128
      %p130 = scmp.ne.s32.totalorder %s119, %s120
      %p131 = scmp.eq.s32.totalorder %s22, 0
      %p132 = por %p130, %p131
      %p133 = scmp.ne.s32.totalorder %s119, %s120
      %p134 = scmp.eq.s32.totalorder %s23, 1
      %p135 = por %p133, %p134
      %p137 = scmp.ne.s32.totalorder %s120, %s136
      %p138 = scmp.eq.s32.totalorder %s23, 0
      %p139 = por %p137, %p138
      %p140 = scmp.le.s32.totalorder 1, %s17
      %p141 = scmp.lt.s32.totalorder %s17, 3
      %p142 = pnand %p140, %p141
      %p143 = pneg %p142
      // Predicated region
      $region9: #{tpu_custom_call.1} parent=5 // pred_check
        _
      $region10: #{tpu_custom_call.1} parent=5 // pred_check_branch
        %145 = sbr.rel (%p142) target = $region12
      $region11: #{tpu_custom_call.1} parent=5 // pred_region
        %s146 = ssub.s32 %s17, 1
        // Predicated region
        $region13: #{tpu_custom_call.1} parent=11 // pred_check
          %p147 = pneg %p64
        $region14: #{tpu_custom_call.1} parent=11 // pred_check_branch
          %149 = sbr.rel (%p147) target = $region16
        $region15: #{tpu_custom_call.1} parent=11 // pred_region
          _
        $region16: #{tpu_custom_call.1} parent=11 // pred_fallthru
          _
        // Predicated region
        $region17: #{tpu_custom_call.1} parent=11 // pred_check
          %p150 = pneg %p85
        $region18: #{tpu_custom_call.1} parent=11 // pred_check_branch
          %152 = sbr.rel (%p150) target = $region20
        $region19: #{tpu_custom_call.1} parent=11 // pred_region
          _
        $region20: #{tpu_custom_call.1} parent=11 // pred_fallthru
          _
        // Predicated region
        $region21: #{tpu_custom_call.1} parent=11 // pred_check
          %p153 = pneg %p106
        $region22: #{tpu_custom_call.1} parent=11 // pred_check_branch
          %155 = sbr.rel (%p153) target = $region24
        $region23: #{tpu_custom_call.1} parent=11 // pred_region
          %157 = vsyncadd [#allocation7], 0
          %s158 = sshll.u32 %s3, 4
          %s159 = int_to_ptr.hbm [resolvable:$true] %s158
          %s160 = sshll.u32 [#allocation6], 4
          %s161 = int_to_ptr.vmem [resolvable:$true] %s160
          %166 = dma.hbm_to_vmem [thread:$0]  %s159, 8192, %s161, [#allocation7], 256, 256, 16
        $region24: #{tpu_custom_call.1} parent=11 // pred_fallthru
          _
      $region12: #{tpu_custom_call.1} parent=5 // pred_fallthru
        _
      %p167 = scmp.lt.s32.totalorder %s17, 2
      // Predicated region
      $region25: #{tpu_custom_call.1} parent=5 // pred_check
        %p168 = pneg %p167
      $region26: #{tpu_custom_call.1} parent=5 // pred_check_branch
        %170 = sbr.rel (%p168) target = $region28
      $region27: #{tpu_custom_call.1} parent=5 // pred_region
        // Predicated region
        $region29: #{tpu_custom_call.1} parent=27 // pred_check
          %p171 = pneg %p37
        $region30: #{tpu_custom_call.1} parent=27 // pred_check_branch
          %173 = sbr.rel (%p171) target = $region32
        $region31: #{tpu_custom_call.1} parent=27 // pred_region
          %s174 = sand.u32 %s27, 1
          %s175 = scalar_lea.sflag [#allocation4], %s174
          %s176 = sand.u32 %s27, 1
          %s177 = smul.addr %s176, 640
          %s178 = scalar_lea.vmem [#allocation3], %s177
          %s179 = smul.u32 16, %s17
          %181 = vsyncadd %s175, 0
          %s182 = smul.addr %s179, 8
          %s183 = scalar_lea.hbm %s0, %s182
          %s184 = sshll.u32 %s183, 4
          %s185 = int_to_ptr.hbm [resolvable:$true] %s184
          %s186 = sshll.u32 %s178, 4
          %s187 = int_to_ptr.vmem [resolvable:$true] %s186
          %192 = dma.hbm_to_vmem [thread:$0]  %s185, 10240, %s187, %s175, 4096, 2048, 128
        $region32: #{tpu_custom_call.1} parent=27 // pred_fallthru
          _
      $region28: #{tpu_custom_call.1} parent=5 // pred_fallthru
        _
      %p193 = scmp.le.s32.totalorder 1, %s17
      %p194 = scmp.lt.s32.totalorder %s17, 3
      %p195 = pnand %p193, %p194
      %p196 = pneg %p195
      // Predicated region
      $region33: #{tpu_custom_call.1} parent=5 // pred_check
        _
      $region34: #{tpu_custom_call.1} parent=5 // pred_check_branch
        %198 = sbr.rel (%p195) target = $region36
      $region35: #{tpu_custom_call.1} parent=5 // pred_region
        %s199 = ssub.s32 %s17, 1
        %s200 = sand.u32 %s30, 1
        %s201 = scalar_lea.sflag [#allocation4], %s200
        %s202 = sand.u32 %s30, 1
        %s203 = smul.addr %s202, 640
        %s204 = scalar_lea.vmem [#allocation3], %s203
        // Predicated region
        $region37: #{tpu_custom_call.1} parent=35 // pred_check
          %p205 = pneg %p43
        $region38: #{tpu_custom_call.1} parent=35 // pred_check_branch
          %207 = sbr.rel (%p205) target = $region40
        $region39: #{tpu_custom_call.1} parent=35 // pred_region
          %209 = dma.done %s201, 10240
        $region40: #{tpu_custom_call.1} parent=35 // pred_fallthru
          _
        // Predicated region
        $region41: #{tpu_custom_call.1} parent=35 // pred_check
          %p210 = pneg %p106
        $region42: #{tpu_custom_call.1} parent=35 // pred_check_branch
          %212 = sbr.rel (%p210) target = $region44
        $region43: #{tpu_custom_call.1} parent=35 // pred_region
          %214 = dma.done [#allocation7], 8192
        $region44: #{tpu_custom_call.1} parent=35 // pred_fallthru
          _
        %s215 = sand.u32 %s30, 1
        %s216 = scalar_lea.sflag [#allocation4], %s215
        %s217 = sand.u32 %s30, 1
        %s218 = smul.addr %s217, 640
        %s219 = scalar_lea.vmem [#allocation3], %s218
        %p220 = pneg %p43
        %p221 = pneg %p40
        %p222 = pneg %p64
        %p223 = pneg %p61
        %p224 = pneg %p85
        %p225 = pneg %p82
        %p226 = pneg %p106
        %p227 = pneg %p103
        %p228 = pneg %p132
        %p229 = pneg %p129
        %s230 = sand.u32 %s119, 1
        %s231 = scalar_lea.sflag [#allocation5], %s230
        %s232 = sand.u32 %s119, 1
        %s233 = smul.addr %s232, 256
        %s234 = scalar_lea.vmem [#allocation8], %s233
        %s235 = smul.u32 16, %s22
        %s236 = smul.u32 16, %s22
        %v237 = vld [vmem:[%s1] sm:$0xff]
        %v238 = vld [vmem:[%s1 + $0x8] sm:$0xff]
        %v239 = vld [vmem:[%s204] sm:$0xff]
        %v240 = vld [vmem:[%s204 + $0x8] sm:$0xff]
        %v241 = vld [vmem:[%s204 + $0x10] sm:$0xff]
        %v242 = vld [vmem:[%s204 + $0x18] sm:$0xff]
        %v243 = vld [vmem:[%s204 + $0x20] sm:$0xff]
        %v244 = vld [vmem:[%s204 + $0x28] sm:$0xff]
        %v245 = vld [vmem:[%s204 + $0x30] sm:$0xff]
        %v246 = vld [vmem:[%s204 + $0x38] sm:$0xff]
        %v247 = vld [vmem:[%s204 + $0x40] sm:$0xff]
        %v248 = vld [vmem:[%s204 + $0x48] sm:$0xff]
        %v249 = vld [vmem:[%s204 + $0x50] sm:$0xff]
        %v250 = vld [vmem:[%s204 + $0x58] sm:$0xff]
        %v251 = vld [vmem:[%s204 + $0x60] sm:$0xff]
        %v252 = vld [vmem:[%s204 + $0x68] sm:$0xff]
        %v253 = vld [vmem:[%s204 + $0x70] sm:$0xff]
        %v254 = vld [vmem:[%s204 + $0x78] sm:$0xff]
        %v255 = vld [vmem:[%s204 + $0x80] sm:$0xff]
        %v256 = vld [vmem:[%s204 + $0x88] sm:$0xff]
        %v257 = vld [vmem:[%s204 + $0x90] sm:$0xff]
        %v258 = vld [vmem:[%s204 + $0x98] sm:$0xff]
        %v259 = vld [vmem:[%s204 + $0xa0] sm:$0xff]
        %v260 = vld [vmem:[%s204 + $0xa8] sm:$0xff]
        %v261 = vld [vmem:[%s204 + $0xb0] sm:$0xff]
        %v262 = vld [vmem:[%s204 + $0xb8] sm:$0xff]
        %v263 = vld [vmem:[%s204 + $0xc0] sm:$0xff]
        %v264 = vld [vmem:[%s204 + $0xc8] sm:$0xff]
        %v265 = vld [vmem:[%s204 + $0xd0] sm:$0xff]
        %v266 = vld [vmem:[%s204 + $0xd8] sm:$0xff]
        %v267 = vld [vmem:[%s204 + $0xe0] sm:$0xff]
        %v268 = vld [vmem:[%s204 + $0xe8] sm:$0xff]
        %v269 = vld [vmem:[%s204 + $0xf0] sm:$0xff]
        %v270 = vld [vmem:[%s204 + $0xf8] sm:$0xff]
        %v271 = vld [vmem:[%s204 + $0x100] sm:$0xff]
        %v272 = vld [vmem:[%s204 + $0x108] sm:$0xff]
        %v273 = vld [vmem:[%s204 + $0x110] sm:$0xff]
        %v274 = vld [vmem:[%s204 + $0x118] sm:$0xff]
        %v275 = vld [vmem:[%s204 + $0x120] sm:$0xff]
        %v276 = vld [vmem:[%s204 + $0x128] sm:$0xff]
        %v277 = vld [vmem:[%s204 + $0x130] sm:$0xff]
        %v278 = vld [vmem:[%s204 + $0x138] sm:$0xff]
        %v279 = vld [vmem:[%s204 + $0x140] sm:$0xff]
        %v280 = vld [vmem:[%s204 + $0x148] sm:$0xff]
        %v281 = vld [vmem:[%s204 + $0x150] sm:$0xff]
        %v282 = vld [vmem:[%s204 + $0x158] sm:$0xff]
        %v283 = vld [vmem:[%s204 + $0x160] sm:$0xff]
        %v284 = vld [vmem:[%s204 + $0x168] sm:$0xff]
        %v285 = vld [vmem:[%s204 + $0x170] sm:$0xff]
        %v286 = vld [vmem:[%s204 + $0x178] sm:$0xff]
        %v287 = vld [vmem:[%s204 + $0x180] sm:$0xff]
        %v288 = vld [vmem:[%s204 + $0x188] sm:$0xff]
        %v289 = vld [vmem:[%s204 + $0x190] sm:$0xff]
        %v290 = vld [vmem:[%s204 + $0x198] sm:$0xff]
        %v291 = vld [vmem:[%s204 + $0x1a0] sm:$0xff]
        %v292 = vld [vmem:[%s204 + $0x1a8] sm:$0xff]
        %v293 = vld [vmem:[%s204 + $0x1b0] sm:$0xff]
        %v294 = vld [vmem:[%s204 + $0x1b8] sm:$0xff]
        %v295 = vld [vmem:[%s204 + $0x1c0] sm:$0xff]
        %v296 = vld [vmem:[%s204 + $0x1c8] sm:$0xff]
        %v297 = vld [vmem:[%s204 + $0x1d0] sm:$0xff]
        %v298 = vld [vmem:[%s204 + $0x1d8] sm:$0xff]
        %v299 = vld [vmem:[%s204 + $0x1e0] sm:$0xff]
        %v300 = vld [vmem:[%s204 + $0x1e8] sm:$0xff]
        %v301 = vld [vmem:[%s204 + $0x1f0] sm:$0xff]
        %v302 = vld [vmem:[%s204 + $0x1f8] sm:$0xff]
        %v303 = vld [vmem:[%s204 + $0x200] sm:$0xf]
        %v304 = vld [vmem:[%s204 + $0x208] sm:$0xf]
        %v305 = vld [vmem:[%s204 + $0x210] sm:$0xf]
        %v306 = vld [vmem:[%s204 + $0x218] sm:$0xf]
        %v307 = vld [vmem:[%s204 + $0x220] sm:$0xf]
        %v308 = vld [vmem:[%s204 + $0x228] sm:$0xf]
        %v309 = vld [vmem:[%s204 + $0x230] sm:$0xf]
        %v310 = vld [vmem:[%s204 + $0x238] sm:$0xf]
        %v311 = vld [vmem:[%s204 + $0x240] sm:$0xf]
        %v312 = vld [vmem:[%s204 + $0x248] sm:$0xf]
        %v313 = vld [vmem:[%s204 + $0x250] sm:$0xf]
        %v314 = vld [vmem:[%s204 + $0x258] sm:$0xf]
        %v315 = vld [vmem:[%s204 + $0x260] sm:$0xf]
        %v316 = vld [vmem:[%s204 + $0x268] sm:$0xf]
        %v317 = vld [vmem:[%s204 + $0x270] sm:$0xf]
        %v318 = vld [vmem:[%s204 + $0x278] sm:$0xf]
        %v319 = vld [vmem:[%s2] sm:$0xff]
        %v320 = vld [vmem:[%s2 + $0x8] sm:$0xff]
        %322 = vset.pattern.permute.xlu0 0
        %323 = vperm.xlu0 %322, %v319
        %v324 = vpop.permute.xlu0 %323
        %327 = vset.pattern.permute.xlu0 0
        %328 = vperm.xlu0 %327, %v320
        %v329 = vpop.permute.xlu0 %328
        %vm331 = vcmask 293888
        %v333 = vsel %vm331, %v237, 0
        %v336 = vsel %vm331, %v238, 0
        %vm338 = vcmask 1043456
        %v340 = vsel %vm338, %v303, 0
        %v343 = vsel %vm338, %v304, 0
        %v346 = vsel %vm338, %v305, 0
        %v349 = vsel %vm338, %v306, 0
        %v352 = vsel %vm338, %v307, 0
        %v355 = vsel %vm338, %v308, 0
        %v358 = vsel %vm338, %v309, 0
        %v361 = vsel %vm338, %v310, 0
        %v364 = vsel %vm338, %v311, 0
        %v367 = vsel %vm338, %v312, 0
        %v370 = vsel %vm338, %v313, 0
        %v373 = vsel %vm338, %v314, 0
        %v376 = vsel %vm338, %v315, 0
        %v379 = vsel %vm338, %v316, 0
        %v382 = vsel %vm338, %v317, 0
        %v385 = vsel %vm338, %v318, 0
        %387 = vmatpush.msra.mxu0 0.0
        %388 = vmatpush.msra.mxu0 0.0
        %389 = vmatpush.msra.mxu0 0.0
        %390 = vmatpush.msra.mxu0 0.0
        %391 = vmatpush.msra.mxu0 0.0
        %392 = vmatpush.msra.mxu0 0.0
        %393 = vmatpush.msra.mxu0 0.0
        %394 = vmatpush.msra.mxu0 0.0
        %395 = vmatpush.msra.mxu0 0.0
        %396 = vmatpush.msra.mxu0 0.0
        %397 = vmatpush.msra.mxu0 0.0
        %398 = vmatpush.msra.mxu0 %v340
        %399 = vmatpush.msra.mxu0 %v287
        %400 = vmatpush.msra.mxu0 %v271
        %401 = vmatpush.msra.mxu0 %v255
        %402 = vmatpush.msra.mxu0 %v239
        %403 = vmatmul.f32.gmra.mxu0 %v333
        %v404 = vpop.f32.mrf.mxu0
        %v405 = vadd.f32 %v324, %v404
        %406 = vmatmul.f32.gmra.mxu0 %v336
        %v407 = vpop.f32.mrf.mxu0
        %v408 = vadd.f32 %v329, %v407
        %409 = vdwg.mxu0
        %410 = vmatpush.msra.mxu0 0.0
        %411 = vmatpush.msra.mxu0 0.0
        %412 = vmatpush.msra.mxu0 0.0
        %413 = vmatpush.msra.mxu0 0.0
        %414 = vmatpush.msra.mxu0 0.0
        %415 = vmatpush.msra.mxu0 0.0
        %416 = vmatpush.msra.mxu0 0.0
        %417 = vmatpush.msra.mxu0 0.0
        %418 = vmatpush.msra.mxu0 0.0
        %419 = vmatpush.msra.mxu0 0.0
        %420 = vmatpush.msra.mxu0 0.0
        %421 = vmatpush.msra.mxu0 %v343
        %422 = vmatpush.msra.mxu0 %v288
        %423 = vmatpush.msra.mxu0 %v272
        %424 = vmatpush.msra.mxu0 %v256
        %425 = vmatpush.msra.mxu0 %v240
        %426 = vmatmul.f32.gmra.mxu0 %v333
        %v427 = vpop.f32.mrf.mxu0
        %v428 = vadd.f32 %v324, %v427
        %429 = vmatmul.f32.gmra.mxu0 %v336
        %v430 = vpop.f32.mrf.mxu0
        %v431 = vadd.f32 %v329, %v430
        %432 = vdwg.mxu0
        %433 = vmatpush.msra.mxu0 0.0
        %434 = vmatpush.msra.mxu0 0.0
        %435 = vmatpush.msra.mxu0 0.0
        %436 = vmatpush.msra.mxu0 0.0
        %437 = vmatpush.msra.mxu0 0.0
        %438 = vmatpush.msra.mxu0 0.0
        %439 = vmatpush.msra.mxu0 0.0
        %440 = vmatpush.msra.mxu0 0.0
        %441 = vmatpush.msra.mxu0 0.0
        %442 = vmatpush.msra.mxu0 0.0
        %443 = vmatpush.msra.mxu0 0.0
        %444 = vmatpush.msra.mxu0 %v346
        %445 = vmatpush.msra.mxu0 %v289
        %446 = vmatpush.msra.mxu0 %v273
        %447 = vmatpush.msra.mxu0 %v257
        %448 = vmatpush.msra.mxu0 %v241
        %449 = vmatmul.f32.gmra.mxu0 %v333
        %v450 = vpop.f32.mrf.mxu0
        %v451 = vadd.f32 %v324, %v450
        %452 = vmatmul.f32.gmra.mxu0 %v336
        %v453 = vpop.f32.mrf.mxu0
        %v454 = vadd.f32 %v329, %v453
        %455 = vdwg.mxu0
        %456 = vmatpush.msra.mxu0 0.0
        %457 = vmatpush.msra.mxu0 0.0
        %458 = vmatpush.msra.mxu0 0.0
        %459 = vmatpush.msra.mxu0 0.0
        %460 = vmatpush.msra.mxu0 0.0
        %461 = vmatpush.msra.mxu0 0.0
        %462 = vmatpush.msra.mxu0 0.0
        %463 = vmatpush.msra.mxu0 0.0
        %464 = vmatpush.msra.mxu0 0.0
        %465 = vmatpush.msra.mxu0 0.0
        %466 = vmatpush.msra.mxu0 0.0
        %467 = vmatpush.msra.mxu0 %v349
        %468 = vmatpush.msra.mxu0 %v290
        %469 = vmatpush.msra.mxu0 %v274
        %470 = vmatpush.msra.mxu0 %v258
        %471 = vmatpush.msra.mxu0 %v242
        %472 = vmatmul.f32.gmra.mxu0 %v333
        %v473 = vpop.f32.mrf.mxu0
        %v474 = vadd.f32 %v324, %v473
        %475 = vmatmul.f32.gmra.mxu0 %v336
        %v476 = vpop.f32.mrf.mxu0
        %v477 = vadd.f32 %v329, %v476
        %478 = vdwg.mxu0
        %479 = vmatpush.msra.mxu0 0.0
        %480 = vmatpush.msra.mxu0 0.0
        %481 = vmatpush.msra.mxu0 0.0
        %482 = vmatpush.msra.mxu0 0.0
        %483 = vmatpush.msra.mxu0 0.0
        %484 = vmatpush.msra.mxu0 0.0
        %485 = vmatpush.msra.mxu0 0.0
        %486 = vmatpush.msra.mxu0 0.0
        %487 = vmatpush.msra.mxu0 0.0
        %488 = vmatpush.msra.mxu0 0.0
        %489 = vmatpush.msra.mxu0 0.0
        %490 = vmatpush.msra.mxu0 %v352
        %491 = vmatpush.msra.mxu0 %v291
        %492 = vmatpush.msra.mxu0 %v275
        %493 = vmatpush.msra.mxu0 %v259
        %494 = vmatpush.msra.mxu0 %v243
        %495 = vmatmul.f32.gmra.mxu0 %v333
        %v496 = vpop.f32.mrf.mxu0
        %v497 = vadd.f32 %v324, %v496
        %498 = vmatmul.f32.gmra.mxu0 %v336
        %v499 = vpop.f32.mrf.mxu0
        %v500 = vadd.f32 %v329, %v499
        %501 = vdwg.mxu0
        %502 = vmatpush.msra.mxu0 0.0
        %503 = vmatpush.msra.mxu0 0.0
        %504 = vmatpush.msra.mxu0 0.0
        %505 = vmatpush.msra.mxu0 0.0
        %506 = vmatpush.msra.mxu0 0.0
        %507 = vmatpush.msra.mxu0 0.0
        %508 = vmatpush.msra.mxu0 0.0
        %509 = vmatpush.msra.mxu0 0.0
        %510 = vmatpush.msra.mxu0 0.0
        %511 = vmatpush.msra.mxu0 0.0
        %512 = vmatpush.msra.mxu0 0.0
        %513 = vmatpush.msra.mxu0 %v355
        %514 = vmatpush.msra.mxu0 %v292
        %515 = vmatpush.msra.mxu0 %v276
        %516 = vmatpush.msra.mxu0 %v260
        %517 = vmatpush.msra.mxu0 %v244
        %518 = vmatmul.f32.gmra.mxu0 %v333
        %v519 = vpop.f32.mrf.mxu0
        %v520 = vadd.f32 %v324, %v519
        %521 = vmatmul.f32.gmra.mxu0 %v336
        %v522 = vpop.f32.mrf.mxu0
        %v523 = vadd.f32 %v329, %v522
        %524 = vdwg.mxu0
        %525 = vmatpush.msra.mxu0 0.0
        %526 = vmatpush.msra.mxu0 0.0
        %527 = vmatpush.msra.mxu0 0.0
        %528 = vmatpush.msra.mxu0 0.0
        %529 = vmatpush.msra.mxu0 0.0
        %530 = vmatpush.msra.mxu0 0.0
        %531 = vmatpush.msra.mxu0 0.0
        %532 = vmatpush.msra.mxu0 0.0
        %533 = vmatpush.msra.mxu0 0.0
        %534 = vmatpush.msra.mxu0 0.0
        %535 = vmatpush.msra.mxu0 0.0
        %536 = vmatpush.msra.mxu0 %v358
        %537 = vmatpush.msra.mxu0 %v293
        %538 = vmatpush.msra.mxu0 %v277
        %539 = vmatpush.msra.mxu0 %v261
        %540 = vmatpush.msra.mxu0 %v245
        %541 = vmatmul.f32.gmra.mxu0 %v333
        %v542 = vpop.f32.mrf.mxu0
        %v543 = vadd.f32 %v324, %v542
        %544 = vmatmul.f32.gmra.mxu0 %v336
        %v545 = vpop.f32.mrf.mxu0
        %v546 = vadd.f32 %v329, %v545
        %547 = vdwg.mxu0
        %548 = vmatpush.msra.mxu0 0.0
        %549 = vmatpush.msra.mxu0 0.0
        %550 = vmatpush.msra.mxu0 0.0
        %551 = vmatpush.msra.mxu0 0.0
        %552 = vmatpush.msra.mxu0 0.0
        %553 = vmatpush.msra.mxu0 0.0
        %554 = vmatpush.msra.mxu0 0.0
        %555 = vmatpush.msra.mxu0 0.0
        %556 = vmatpush.msra.mxu0 0.0
        %557 = vmatpush.msra.mxu0 0.0
        %558 = vmatpush.msra.mxu0 0.0
        %559 = vmatpush.msra.mxu0 %v361
        %560 = vmatpush.msra.mxu0 %v294
        %561 = vmatpush.msra.mxu0 %v278
        %562 = vmatpush.msra.mxu0 %v262
        %563 = vmatpush.msra.mxu0 %v246
        %564 = vmatmul.f32.gmra.mxu0 %v333
        %v565 = vpop.f32.mrf.mxu0
        %v566 = vadd.f32 %v324, %v565
        %567 = vmatmul.f32.gmra.mxu0 %v336
        %v568 = vpop.f32.mrf.mxu0
        %v569 = vadd.f32 %v329, %v568
        %570 = vdwg.mxu0
        %571 = vmatpush.msra.mxu0 0.0
        %572 = vmatpush.msra.mxu0 0.0
        %573 = vmatpush.msra.mxu0 0.0
        %574 = vmatpush.msra.mxu0 0.0
        %575 = vmatpush.msra.mxu0 0.0
        %576 = vmatpush.msra.mxu0 0.0
        %577 = vmatpush.msra.mxu0 0.0
        %578 = vmatpush.msra.mxu0 0.0
        %579 = vmatpush.msra.mxu0 0.0
        %580 = vmatpush.msra.mxu0 0.0
        %581 = vmatpush.msra.mxu0 0.0
        %582 = vmatpush.msra.mxu0 %v364
        %583 = vmatpush.msra.mxu0 %v295
        %584 = vmatpush.msra.mxu0 %v279
        %585 = vmatpush.msra.mxu0 %v263
        %586 = vmatpush.msra.mxu0 %v247
        %587 = vmatmul.f32.gmra.mxu0 %v333
        %v588 = vpop.f32.mrf.mxu0
        %v589 = vadd.f32 %v324, %v588
        %590 = vmatmul.f32.gmra.mxu0 %v336
        %v591 = vpop.f32.mrf.mxu0
        %v592 = vadd.f32 %v329, %v591
        %593 = vdwg.mxu0
        %594 = vmatpush.msra.mxu0 0.0
        %595 = vmatpush.msra.mxu0 0.0
        %596 = vmatpush.msra.mxu0 0.0
        %597 = vmatpush.msra.mxu0 0.0
        %598 = vmatpush.msra.mxu0 0.0
        %599 = vmatpush.msra.mxu0 0.0
        %600 = vmatpush.msra.mxu0 0.0
        %601 = vmatpush.msra.mxu0 0.0
        %602 = vmatpush.msra.mxu0 0.0
        %603 = vmatpush.msra.mxu0 0.0
        %604 = vmatpush.msra.mxu0 0.0
        %605 = vmatpush.msra.mxu0 %v367
        %606 = vmatpush.msra.mxu0 %v296
        %607 = vmatpush.msra.mxu0 %v280
        %608 = vmatpush.msra.mxu0 %v264
        %609 = vmatpush.msra.mxu0 %v248
        %610 = vmatmul.f32.gmra.mxu0 %v333
        %v611 = vpop.f32.mrf.mxu0
        %v612 = vadd.f32 %v324, %v611
        %613 = vmatmul.f32.gmra.mxu0 %v336
        %v614 = vpop.f32.mrf.mxu0
        %v615 = vadd.f32 %v329, %v614
        %616 = vdwg.mxu0
        %617 = vmatpush.msra.mxu0 0.0
        %618 = vmatpush.msra.mxu0 0.0
        %619 = vmatpush.msra.mxu0 0.0
        %620 = vmatpush.msra.mxu0 0.0
        %621 = vmatpush.msra.mxu0 0.0
        %622 = vmatpush.msra.mxu0 0.0
        %623 = vmatpush.msra.mxu0 0.0
        %624 = vmatpush.msra.mxu0 0.0
        %625 = vmatpush.msra.mxu0 0.0
        %626 = vmatpush.msra.mxu0 0.0
        %627 = vmatpush.msra.mxu0 0.0
        %628 = vmatpush.msra.mxu0 %v370
        %629 = vmatpush.msra.mxu0 %v297
        %630 = vmatpush.msra.mxu0 %v281
        %631 = vmatpush.msra.mxu0 %v265
        %632 = vmatpush.msra.mxu0 %v249
        %633 = vmatmul.f32.gmra.mxu0 %v333
        %v634 = vpop.f32.mrf.mxu0
        %v635 = vadd.f32 %v324, %v634
        %636 = vmatmul.f32.gmra.mxu0 %v336
        %v637 = vpop.f32.mrf.mxu0
        %v638 = vadd.f32 %v329, %v637
        %639 = vdwg.mxu0
        %640 = vmatpush.msra.mxu0 0.0
        %641 = vmatpush.msra.mxu0 0.0
        %642 = vmatpush.msra.mxu0 0.0
        %643 = vmatpush.msra.mxu0 0.0
        %644 = vmatpush.msra.mxu0 0.0
        %645 = vmatpush.msra.mxu0 0.0
        %646 = vmatpush.msra.mxu0 0.0
        %647 = vmatpush.msra.mxu0 0.0
        %648 = vmatpush.msra.mxu0 0.0
        %649 = vmatpush.msra.mxu0 0.0
        %650 = vmatpush.msra.mxu0 0.0
        %651 = vmatpush.msra.mxu0 %v373
        %652 = vmatpush.msra.mxu0 %v298
        %653 = vmatpush.msra.mxu0 %v282
        %654 = vmatpush.msra.mxu0 %v266
        %655 = vmatpush.msra.mxu0 %v250
        %656 = vmatmul.f32.gmra.mxu0 %v333
        %v657 = vpop.f32.mrf.mxu0
        %v658 = vadd.f32 %v324, %v657
        %659 = vmatmul.f32.gmra.mxu0 %v336
        %v660 = vpop.f32.mrf.mxu0
        %v661 = vadd.f32 %v329, %v660
        %662 = vdwg.mxu0
        %663 = vmatpush.msra.mxu0 0.0
        %664 = vmatpush.msra.mxu0 0.0
        %665 = vmatpush.msra.mxu0 0.0
        %666 = vmatpush.msra.mxu0 0.0
        %667 = vmatpush.msra.mxu0 0.0
        %668 = vmatpush.msra.mxu0 0.0
        %669 = vmatpush.msra.mxu0 0.0
        %670 = vmatpush.msra.mxu0 0.0
        %671 = vmatpush.msra.mxu0 0.0
        %672 = vmatpush.msra.mxu0 0.0
        %673 = vmatpush.msra.mxu0 0.0
        %674 = vmatpush.msra.mxu0 %v376
        %675 = vmatpush.msra.mxu0 %v299
        %676 = vmatpush.msra.mxu0 %v283
        %677 = vmatpush.msra.mxu0 %v267
        %678 = vmatpush.msra.mxu0 %v251
        %679 = vmatmul.f32.gmra.mxu0 %v333
        %v680 = vpop.f32.mrf.mxu0
        %v681 = vadd.f32 %v324, %v680
        %682 = vmatmul.f32.gmra.mxu0 %v336
        %v683 = vpop.f32.mrf.mxu0
        %v684 = vadd.f32 %v329, %v683
        %685 = vdwg.mxu0
        %686 = vmatpush.msra.mxu0 0.0
        %687 = vmatpush.msra.mxu0 0.0
        %688 = vmatpush.msra.mxu0 0.0
        %689 = vmatpush.msra.mxu0 0.0
        %690 = vmatpush.msra.mxu0 0.0
        %691 = vmatpush.msra.mxu0 0.0
        %692 = vmatpush.msra.mxu0 0.0
        %693 = vmatpush.msra.mxu0 0.0
        %694 = vmatpush.msra.mxu0 0.0
        %695 = vmatpush.msra.mxu0 0.0
        %696 = vmatpush.msra.mxu0 0.0
        %697 = vmatpush.msra.mxu0 %v379
        %698 = vmatpush.msra.mxu0 %v300
        %699 = vmatpush.msra.mxu0 %v284
        %700 = vmatpush.msra.mxu0 %v268
        %701 = vmatpush.msra.mxu0 %v252
        %702 = vmatmul.f32.gmra.mxu0 %v333
        %v703 = vpop.f32.mrf.mxu0
        %v704 = vadd.f32 %v324, %v703
        %705 = vmatmul.f32.gmra.mxu0 %v336
        %v706 = vpop.f32.mrf.mxu0
        %v707 = vadd.f32 %v329, %v706
        %708 = vdwg.mxu0
        %709 = vmatpush.msra.mxu0 0.0
        %710 = vmatpush.msra.mxu0 0.0
        %711 = vmatpush.msra.mxu0 0.0
        %712 = vmatpush.msra.mxu0 0.0
        %713 = vmatpush.msra.mxu0 0.0
        %714 = vmatpush.msra.mxu0 0.0
        %715 = vmatpush.msra.mxu0 0.0
        %716 = vmatpush.msra.mxu0 0.0
        %717 = vmatpush.msra.mxu0 0.0
        %718 = vmatpush.msra.mxu0 0.0
        %719 = vmatpush.msra.mxu0 0.0
        %720 = vmatpush.msra.mxu0 %v382
        %721 = vmatpush.msra.mxu0 %v301
        %722 = vmatpush.msra.mxu0 %v285
        %723 = vmatpush.msra.mxu0 %v269
        %724 = vmatpush.msra.mxu0 %v253
        %725 = vmatmul.f32.gmra.mxu0 %v333
        %v726 = vpop.f32.mrf.mxu0
        %v727 = vadd.f32 %v324, %v726
        %728 = vmatmul.f32.gmra.mxu0 %v336
        %v729 = vpop.f32.mrf.mxu0
        %v730 = vadd.f32 %v329, %v729
        %731 = vdwg.mxu0
        %732 = vmatpush.msra.mxu0 0.0
        %733 = vmatpush.msra.mxu0 0.0
        %734 = vmatpush.msra.mxu0 0.0
        %735 = vmatpush.msra.mxu0 0.0
        %736 = vmatpush.msra.mxu0 0.0
        %737 = vmatpush.msra.mxu0 0.0
        %738 = vmatpush.msra.mxu0 0.0
        %739 = vmatpush.msra.mxu0 0.0
        %740 = vmatpush.msra.mxu0 0.0
        %741 = vmatpush.msra.mxu0 0.0
        %742 = vmatpush.msra.mxu0 0.0
        %743 = vmatpush.msra.mxu0 %v385
        %744 = vmatpush.msra.mxu0 %v302
        %745 = vmatpush.msra.mxu0 %v286
        %746 = vmatpush.msra.mxu0 %v270
        %747 = vmatpush.msra.mxu0 %v254
        %748 = vmatmul.f32.gmra.mxu0 %v333
        %v749 = vpop.f32.mrf.mxu0
        %v750 = vadd.f32 %v324, %v749
        %751 = vmatmul.f32.gmra.mxu0 %v336
        %v752 = vpop.f32.mrf.mxu0
        %v753 = vadd.f32 %v329, %v752
        %754 = vdwg.mxu0
        %v755 = vmax.f32 %v405, 0.0
        %v756 = vmax.f32 %v428, 0.0
        %v757 = vmax.f32 %v451, 0.0
        %v758 = vmax.f32 %v474, 0.0
        %v759 = vmax.f32 %v497, 0.0
        %v760 = vmax.f32 %v520, 0.0
        %v761 = vmax.f32 %v543, 0.0
        %v762 = vmax.f32 %v566, 0.0
        %v763 = vmax.f32 %v589, 0.0
        %v764 = vmax.f32 %v612, 0.0
        %v765 = vmax.f32 %v635, 0.0
        %v766 = vmax.f32 %v658, 0.0
        %v767 = vmax.f32 %v681, 0.0
        %v768 = vmax.f32 %v704, 0.0
        %v769 = vmax.f32 %v727, 0.0
        %v770 = vmax.f32 %v750, 0.0
        %v771 = vmax.f32 %v408, 0.0
        %v772 = vmax.f32 %v431, 0.0
        %v773 = vmax.f32 %v454, 0.0
        %v774 = vmax.f32 %v477, 0.0
        %v775 = vmax.f32 %v500, 0.0
        %v776 = vmax.f32 %v523, 0.0
        %v777 = vmax.f32 %v546, 0.0
        %v778 = vmax.f32 %v569, 0.0
        %v779 = vmax.f32 %v592, 0.0
        %v780 = vmax.f32 %v615, 0.0
        %v781 = vmax.f32 %v638, 0.0
        %v782 = vmax.f32 %v661, 0.0
        %v783 = vmax.f32 %v684, 0.0
        %v784 = vmax.f32 %v707, 0.0
        %v785 = vmax.f32 %v730, 0.0
        %v786 = vmax.f32 %v753, 0.0
        %787 = vst [vmem:[%s234] sm:$0xff] %v755
        %788 = vst [vmem:[%s234 + $0x8] sm:$0xff] %v756
        %789 = vst [vmem:[%s234 + $0x10] sm:$0xff] %v757
        %790 = vst [vmem:[%s234 + $0x18] sm:$0xff] %v758
        %791 = vst [vmem:[%s234 + $0x20] sm:$0xff] %v759
        %792 = vst [vmem:[%s234 + $0x28] sm:$0xff] %v760
        %793 = vst [vmem:[%s234 + $0x30] sm:$0xff] %v761
        %794 = vst [vmem:[%s234 + $0x38] sm:$0xff] %v762
        %795 = vst [vmem:[%s234 + $0x40] sm:$0xff] %v763
        %796 = vst [vmem:[%s234 + $0x48] sm:$0xff] %v764
        %797 = vst [vmem:[%s234 + $0x50] sm:$0xff] %v765
        %798 = vst [vmem:[%s234 + $0x58] sm:$0xff] %v766
        %799 = vst [vmem:[%s234 + $0x60] sm:$0xff] %v767
        %800 = vst [vmem:[%s234 + $0x68] sm:$0xff] %v768
        %801 = vst [vmem:[%s234 + $0x70] sm:$0xff] %v769
        %802 = vst [vmem:[%s234 + $0x78] sm:$0xff] %v770
        %803 = vst [vmem:[#allocation2] sm:$0xff] %v771
        %804 = vst [vmem:[#allocation2 + $0x8] sm:$0xff] %v772
        %805 = vst [vmem:[#allocation2 + $0x10] sm:$0xff] %v773
        %806 = vst [vmem:[#allocation2 + $0x18] sm:$0xff] %v774
        %807 = vst [vmem:[#allocation2 + $0x20] sm:$0xff] %v775
        %808 = vst [vmem:[#allocation2 + $0x28] sm:$0xff] %v776
        %809 = vst [vmem:[#allocation2 + $0x30] sm:$0xff] %v777
        %810 = vst [vmem:[#allocation2 + $0x38] sm:$0xff] %v778
        %811 = vst [vmem:[#allocation2 + $0x40] sm:$0xff] %v779
        %812 = vst [vmem:[#allocation2 + $0x48] sm:$0xff] %v780
        %813 = vst [vmem:[#allocation2 + $0x50] sm:$0xff] %v781
        %814 = vst [vmem:[#allocation2 + $0x58] sm:$0xff] %v782
        %815 = vst [vmem:[#allocation2 + $0x60] sm:$0xff] %v783
        %816 = vst [vmem:[#allocation2 + $0x68] sm:$0xff] %v784
        %817 = vst [vmem:[#allocation2 + $0x70] sm:$0xff] %v785
        %818 = vst [vmem:[#allocation2 + $0x78] sm:$0xff] %v786
        %v819 = vld [vmem:[#allocation2] sm:$0xff]
        %v820 = vld [vmem:[#allocation2 + $0x8] sm:$0xff]
        %v821 = vld [vmem:[#allocation2 + $0x10] sm:$0xff]
        %v822 = vld [vmem:[#allocation2 + $0x18] sm:$0xff]
        %v823 = vld [vmem:[#allocation2 + $0x20] sm:$0xff]
        %v824 = vld [vmem:[#allocation2 + $0x28] sm:$0xff]
        %v825 = vld [vmem:[#allocation2 + $0x30] sm:$0xff]
        %v826 = vld [vmem:[#allocation2 + $0x38] sm:$0xff]
        %v827 = vld [vmem:[#allocation2 + $0x40] sm:$0xff]
        %v828 = vld [vmem:[#allocation2 + $0x48] sm:$0xff]
        %v829 = vld [vmem:[#allocation2 + $0x50] sm:$0xff]
        %v830 = vld [vmem:[#allocation2 + $0x58] sm:$0xff]
        %v831 = vld [vmem:[#allocation2 + $0x60] sm:$0xff]
        %v832 = vld [vmem:[#allocation2 + $0x68] sm:$0xff]
        %v833 = vld [vmem:[#allocation2 + $0x70] sm:$0xff]
        %v834 = vld [vmem:[#allocation2 + $0x78] sm:$0xff]
        %v835 = vld [vmem:[#allocation6] sm:$0xff]
        %v836 = vld [vmem:[#allocation6 + $0x8] sm:$0xff]
        %v837 = vld [vmem:[#allocation6 + $0x10] sm:$0xff]
        %v838 = vld [vmem:[#allocation6 + $0x18] sm:$0xff]
        %v839 = vld [vmem:[#allocation6 + $0x20] sm:$0xff]
        %v840 = vld [vmem:[#allocation6 + $0x28] sm:$0xff]
        %v841 = vld [vmem:[#allocation6 + $0x30] sm:$0xff]
        %v842 = vld [vmem:[#allocation6 + $0x38] sm:$0xff]
        %v843 = vld [vmem:[#allocation6 + $0x40] sm:$0xff]
        %v844 = vld [vmem:[#allocation6 + $0x48] sm:$0xff]
        %v845 = vld [vmem:[#allocation6 + $0x50] sm:$0xff]
        %v846 = vld [vmem:[#allocation6 + $0x58] sm:$0xff]
        %v847 = vld [vmem:[#allocation6 + $0x60] sm:$0xff]
        %v848 = vld [vmem:[#allocation6 + $0x68] sm:$0xff]
        %v849 = vld [vmem:[#allocation6 + $0x70] sm:$0xff]
        %v850 = vld [vmem:[#allocation6 + $0x78] sm:$0xff]
        %v851 = vld [vmem:[#allocation6 + $0x80] sm:$0xff]
        %v852 = vld [vmem:[#allocation6 + $0x88] sm:$0xff]
        %v853 = vld [vmem:[#allocation6 + $0x90] sm:$0xff]
        %v854 = vld [vmem:[#allocation6 + $0x98] sm:$0xff]
        %v855 = vld [vmem:[#allocation6 + $0xa0] sm:$0xff]
        %v856 = vld [vmem:[#allocation6 + $0xa8] sm:$0xff]
        %v857 = vld [vmem:[#allocation6 + $0xb0] sm:$0xff]
        %v858 = vld [vmem:[#allocation6 + $0xb8] sm:$0xff]
        %v859 = vld [vmem:[#allocation6 + $0xc0] sm:$0xff]
        %v860 = vld [vmem:[#allocation6 + $0xc8] sm:$0xff]
        %v861 = vld [vmem:[#allocation6 + $0xd0] sm:$0xff]
        %v862 = vld [vmem:[#allocation6 + $0xd8] sm:$0xff]
        %v863 = vld [vmem:[#allocation6 + $0xe0] sm:$0xff]
        %v864 = vld [vmem:[#allocation6 + $0xe8] sm:$0xff]
        %v865 = vld [vmem:[#allocation6 + $0xf0] sm:$0xff]
        %v866 = vld [vmem:[#allocation6 + $0xf8] sm:$0xff]
        %v867 = vld [vmem:[#allocation6 + $0x100] sm:$0xff]
        %v868 = vld [vmem:[#allocation6 + $0x108] sm:$0xff]
        %v869 = vld [vmem:[#allocation6 + $0x110] sm:$0xff]
        %v870 = vld [vmem:[#allocation6 + $0x118] sm:$0xff]
        %v871 = vld [vmem:[#allocation6 + $0x120] sm:$0xff]
        %v872 = vld [vmem:[#allocation6 + $0x128] sm:$0xff]
        %v873 = vld [vmem:[#allocation6 + $0x130] sm:$0xff]
        %v874 = vld [vmem:[#allocation6 + $0x138] sm:$0xff]
        %v875 = vld [vmem:[#allocation6 + $0x140] sm:$0xff]
        %v876 = vld [vmem:[#allocation6 + $0x148] sm:$0xff]
        %v877 = vld [vmem:[#allocation6 + $0x150] sm:$0xff]
        %v878 = vld [vmem:[#allocation6 + $0x158] sm:$0xff]
        %v879 = vld [vmem:[#allocation6 + $0x160] sm:$0xff]
        %v880 = vld [vmem:[#allocation6 + $0x168] sm:$0xff]
        %v881 = vld [vmem:[#allocation6 + $0x170] sm:$0xff]
        %v882 = vld [vmem:[#allocation6 + $0x178] sm:$0xff]
        %v883 = vld [vmem:[#allocation6 + $0x180] sm:$0xff]
        %v884 = vld [vmem:[#allocation6 + $0x188] sm:$0xff]
        %v885 = vld [vmem:[#allocation6 + $0x190] sm:$0xff]
        %v886 = vld [vmem:[#allocation6 + $0x198] sm:$0xff]
        %v887 = vld [vmem:[#allocation6 + $0x1a0] sm:$0xff]
        %v888 = vld [vmem:[#allocation6 + $0x1a8] sm:$0xff]
        %v889 = vld [vmem:[#allocation6 + $0x1b0] sm:$0xff]
        %v890 = vld [vmem:[#allocation6 + $0x1b8] sm:$0xff]
        %v891 = vld [vmem:[#allocation6 + $0x1c0] sm:$0xff]
        %v892 = vld [vmem:[#allocation6 + $0x1c8] sm:$0xff]
        %v893 = vld [vmem:[#allocation6 + $0x1d0] sm:$0xff]
        %v894 = vld [vmem:[#allocation6 + $0x1d8] sm:$0xff]
        %v895 = vld [vmem:[#allocation6 + $0x1e0] sm:$0xff]
        %v896 = vld [vmem:[#allocation6 + $0x1e8] sm:$0xff]
        %v897 = vld [vmem:[#allocation6 + $0x1f0] sm:$0xff]
        %v898 = vld [vmem:[#allocation6 + $0x1f8] sm:$0xff]
        %899 = vmatpush.msra.mxu0 %v865
        %900 = vmatpush.msra.mxu0 %v863
        %901 = vmatpush.msra.mxu0 %v861
        %902 = vmatpush.msra.mxu0 %v859
        %903 = vmatpush.msra.mxu0 %v857
        %904 = vmatpush.msra.mxu0 %v855
        %905 = vmatpush.msra.mxu0 %v853
        %906 = vmatpush.msra.mxu0 %v851
        %907 = vmatpush.msra.mxu0 %v849
        %908 = vmatpush.msra.mxu0 %v847
        %909 = vmatpush.msra.mxu0 %v845
        %910 = vmatpush.msra.mxu0 %v843
        %911 = vmatpush.msra.mxu0 %v841
        %912 = vmatpush.msra.mxu0 %v839
        %913 = vmatpush.msra.mxu0 %v837
        %914 = vmatpush.msra.mxu0 %v835
        %915 = vmatmul.f32.gmra.mxu0 %v819
        %v916 = vpop.f32.mrf.mxu0
        %v917 = vadd.f32 0.0, %v916
        %918 = vmatmul.f32.gmra.mxu0 %v821
        %v919 = vpop.f32.mrf.mxu0
        %v920 = vadd.f32 0.0, %v919
        %921 = vmatmul.f32.gmra.mxu0 %v823
        %v922 = vpop.f32.mrf.mxu0
        %v923 = vadd.f32 0.0, %v922
        %924 = vmatmul.f32.gmra.mxu0 %v825
        %v925 = vpop.f32.mrf.mxu0
        %v926 = vadd.f32 0.0, %v925
        %927 = vmatmul.f32.gmra.mxu0 %v827
        %v928 = vpop.f32.mrf.mxu0
        %v929 = vadd.f32 0.0, %v928
        %930 = vmatmul.f32.gmra.mxu0 %v829
        %v931 = vpop.f32.mrf.mxu0
        %v932 = vadd.f32 0.0, %v931
        %933 = vmatmul.f32.gmra.mxu0 %v831
        %v934 = vpop.f32.mrf.mxu0
        %v935 = vadd.f32 0.0, %v934
        %936 = vmatmul.f32.gmra.mxu0 %v833
        %v937 = vpop.f32.mrf.mxu0
        %v938 = vadd.f32 0.0, %v937
        %939 = vdwg.mxu0
        %940 = vmatpush.msra.mxu0 %v897
        %941 = vmatpush.msra.mxu0 %v895
        %942 = vmatpush.msra.mxu0 %v893
        %943 = vmatpush.msra.mxu0 %v891
        %944 = vmatpush.msra.mxu0 %v889
        %945 = vmatpush.msra.mxu0 %v887
        %946 = vmatpush.msra.mxu0 %v885
        %947 = vmatpush.msra.mxu0 %v883
        %948 = vmatpush.msra.mxu0 %v881
        %949 = vmatpush.msra.mxu0 %v879
        %950 = vmatpush.msra.mxu0 %v877
        %951 = vmatpush.msra.mxu0 %v875
        %952 = vmatpush.msra.mxu0 %v873
        %953 = vmatpush.msra.mxu0 %v871
        %954 = vmatpush.msra.mxu0 %v869
        %955 = vmatpush.msra.mxu0 %v867
        %956 = vmatmul.f32.gmra.mxu0 %v820
        %v957 = vpop.f32.mrf.mxu0
        %v958 = vadd.f32 %v917, %v957
        %959 = vmatmul.f32.gmra.mxu0 %v822
        %v960 = vpop.f32.mrf.mxu0
        %v961 = vadd.f32 %v920, %v960
        %962 = vmatmul.f32.gmra.mxu0 %v824
        %v963 = vpop.f32.mrf.mxu0
        %v964 = vadd.f32 %v923, %v963
        %965 = vmatmul.f32.gmra.mxu0 %v826
        %v966 = vpop.f32.mrf.mxu0
        %v967 = vadd.f32 %v926, %v966
        %968 = vmatmul.f32.gmra.mxu0 %v828
        %v969 = vpop.f32.mrf.mxu0
        %v970 = vadd.f32 %v929, %v969
        %971 = vmatmul.f32.gmra.mxu0 %v830
        %v972 = vpop.f32.mrf.mxu0
        %v973 = vadd.f32 %v932, %v972
        %974 = vmatmul.f32.gmra.mxu0 %v832
        %v975 = vpop.f32.mrf.mxu0
        %v976 = vadd.f32 %v935, %v975
        %977 = vmatmul.f32.gmra.mxu0 %v834
        %v978 = vpop.f32.mrf.mxu0
        %v979 = vadd.f32 %v938, %v978
        %980 = vdwg.mxu0
        %981 = vmatpush.msra.mxu0 %v866
        %982 = vmatpush.msra.mxu0 %v864
        %983 = vmatpush.msra.mxu0 %v862
        %984 = vmatpush.msra.mxu0 %v860
        %985 = vmatpush.msra.mxu0 %v858
        %986 = vmatpush.msra.mxu0 %v856
        %987 = vmatpush.msra.mxu0 %v854
        %988 = vmatpush.msra.mxu0 %v852
        %989 = vmatpush.msra.mxu0 %v850
        %990 = vmatpush.msra.mxu0 %v848
        %991 = vmatpush.msra.mxu0 %v846
        %992 = vmatpush.msra.mxu0 %v844
        %993 = vmatpush.msra.mxu0 %v842
        %994 = vmatpush.msra.mxu0 %v840
        %995 = vmatpush.msra.mxu0 %v838
        %996 = vmatpush.msra.mxu0 %v836
        %997 = vmatmul.f32.gmra.mxu0 %v819
        %v998 = vpop.f32.mrf.mxu0
        %v999 = vadd.f32 0.0, %v998
        %1000 = vmatmul.f32.gmra.mxu0 %v821
        %v1001 = vpop.f32.mrf.mxu0
        %v1002 = vadd.f32 0.0, %v1001
        %1003 = vmatmul.f32.gmra.mxu0 %v823
        %v1004 = vpop.f32.mrf.mxu0
        %v1005 = vadd.f32 0.0, %v1004
        %1006 = vmatmul.f32.gmra.mxu0 %v825
        %v1007 = vpop.f32.mrf.mxu0
        %v1008 = vadd.f32 0.0, %v1007
        %1009 = vmatmul.f32.gmra.mxu0 %v827
        %v1010 = vpop.f32.mrf.mxu0
        %v1011 = vadd.f32 0.0, %v1010
        %1012 = vmatmul.f32.gmra.mxu0 %v829
        %v1013 = vpop.f32.mrf.mxu0
        %v1014 = vadd.f32 0.0, %v1013
        %1015 = vmatmul.f32.gmra.mxu0 %v831
        %v1016 = vpop.f32.mrf.mxu0
        %v1017 = vadd.f32 0.0, %v1016
        %1018 = vmatmul.f32.gmra.mxu0 %v833
        %v1019 = vpop.f32.mrf.mxu0
        %v1020 = vadd.f32 0.0, %v1019
        %1021 = vdwg.mxu0
        %1022 = vmatpush.msra.mxu0 %v898
        %1023 = vmatpush.msra.mxu0 %v896
        %1024 = vmatpush.msra.mxu0 %v894
        %1025 = vmatpush.msra.mxu0 %v892
        %1026 = vmatpush.msra.mxu0 %v890
        %1027 = vmatpush.msra.mxu0 %v888
        %1028 = vmatpush.msra.mxu0 %v886
        %1029 = vmatpush.msra.mxu0 %v884
        %1030 = vmatpush.msra.mxu0 %v882
        %1031 = vmatpush.msra.mxu0 %v880
        %1032 = vmatpush.msra.mxu0 %v878
        %1033 = vmatpush.msra.mxu0 %v876
        %1034 = vmatpush.msra.mxu0 %v874
        %1035 = vmatpush.msra.mxu0 %v872
        %1036 = vmatpush.msra.mxu0 %v870
        %1037 = vmatpush.msra.mxu0 %v868
        %1038 = vmatmul.f32.gmra.mxu0 %v820
        %v1039 = vpop.f32.mrf.mxu0
        %v1040 = vadd.f32 %v999, %v1039
        %1041 = vmatmul.f32.gmra.mxu0 %v822
        %v1042 = vpop.f32.mrf.mxu0
        %v1043 = vadd.f32 %v1002, %v1042
        %1044 = vmatmul.f32.gmra.mxu0 %v824
        %v1045 = vpop.f32.mrf.mxu0
        %v1046 = vadd.f32 %v1005, %v1045
        %1047 = vmatmul.f32.gmra.mxu0 %v826
        %v1048 = vpop.f32.mrf.mxu0
        %v1049 = vadd.f32 %v1008, %v1048
        %1050 = vmatmul.f32.gmra.mxu0 %v828
        %v1051 = vpop.f32.mrf.mxu0
        %v1052 = vadd.f32 %v1011, %v1051
        %1053 = vmatmul.f32.gmra.mxu0 %v830
        %v1054 = vpop.f32.mrf.mxu0
        %v1055 = vadd.f32 %v1014, %v1054
        %1056 = vmatmul.f32.gmra.mxu0 %v832
        %v1057 = vpop.f32.mrf.mxu0
        %v1058 = vadd.f32 %v1017, %v1057
        %1059 = vmatmul.f32.gmra.mxu0 %v834
        %v1060 = vpop.f32.mrf.mxu0
        %v1061 = vadd.f32 %v1020, %v1060
        %1062 = vdwg.mxu0
        %1063 = vst [vmem:[%s234 + $0x80] sm:$0xff] %v958
        %1064 = vst [vmem:[%s234 + $0x88] sm:$0xff] %v1040
        %1065 = vst [vmem:[%s234 + $0x90] sm:$0xff] %v961
        %1066 = vst [vmem:[%s234 + $0x98] sm:$0xff] %v1043
        %1067 = vst [vmem:[%s234 + $0xa0] sm:$0xff] %v964
        %1068 = vst [vmem:[%s234 + $0xa8] sm:$0xff] %v1046
        %1069 = vst [vmem:[%s234 + $0xb0] sm:$0xff] %v967
        %1070 = vst [vmem:[%s234 + $0xb8] sm:$0xff] %v1049
        %1071 = vst [vmem:[%s234 + $0xc0] sm:$0xff] %v970
        %1072 = vst [vmem:[%s234 + $0xc8] sm:$0xff] %v1052
        %1073 = vst [vmem:[%s234 + $0xd0] sm:$0xff] %v973
        %1074 = vst [vmem:[%s234 + $0xd8] sm:$0xff] %v1055
        %1075 = vst [vmem:[%s234 + $0xe0] sm:$0xff] %v976
        %1076 = vst [vmem:[%s234 + $0xe8] sm:$0xff] %v1058
        %1077 = vst [vmem:[%s234 + $0xf0] sm:$0xff] %v979
        %1078 = vst [vmem:[%s234 + $0xf8] sm:$0xff] %v1061
        %s1079 = sand.u32 %s119, 1
        %s1080 = scalar_lea.sflag [#allocation5], %s1079
        %s1081 = sand.u32 %s119, 1
        %s1082 = smul.addr %s1081, 256
        %s1083 = scalar_lea.vmem [#allocation8], %s1082
        // Predicated region
        $region45: #{tpu_custom_call.1} parent=35 // pred_check
          %p1084 = pneg %p129
        $region46: #{tpu_custom_call.1} parent=35 // pred_check_branch
          %1086 = sbr.rel (%p1084) target = $region48
        $region47: #{tpu_custom_call.1} parent=35 // pred_region
          %s1087 = smul.u32 16, %s22
          %1089 = vsyncadd %s1080, 0
          %s1090 = smul.addr %s1087, 8
          %s1091 = scalar_lea.hbm %s4, %s1090
          %s1092 = sshll.u32 %s1083, 4
          %s1093 = int_to_ptr.vmem [resolvable:$true] %s1092
          %s1094 = sshll.u32 %s1091, 4
          %s1095 = int_to_ptr.hbm [resolvable:$true] %s1094
          %1100 = dma.vmem_to_hbm [thread:$0]  %s1093, 4096, %s1095, %s1080, 2048, 4096, 128
        $region48: #{tpu_custom_call.1} parent=35 // pred_fallthru
          _
      $region36: #{tpu_custom_call.1} parent=5 // pred_fallthru
        _
      %p1101 = scmp.le.s32.totalorder 2, %s17
      // Predicated region
      $region49: #{tpu_custom_call.1} parent=5 // pred_check
        %p1102 = pneg %p1101
      $region50: #{tpu_custom_call.1} parent=5 // pred_check_branch
        %1104 = sbr.rel (%p1102) target = $region52
      $region51: #{tpu_custom_call.1} parent=5 // pred_region
        %s1105 = ssub.s32 %s17, 2
        // Predicated region
        $region53: #{tpu_custom_call.1} parent=51 // pred_check
          %p1106 = pneg %p135
        $region54: #{tpu_custom_call.1} parent=51 // pred_check_branch
          %1108 = sbr.rel (%p1106) target = $region56
        $region55: #{tpu_custom_call.1} parent=51 // pred_region
          %s1109 = sand.u32 %s120, 1
          %s1110 = scalar_lea.sflag [#allocation5], %s1109
          %s1111 = sand.u32 %s120, 1
          %s1112 = smul.addr %s1111, 256
          %s1113 = scalar_lea.vmem [#allocation8], %s1112
          %1115 = dma.done %s1110, 4096
        $region56: #{tpu_custom_call.1} parent=51 // pred_fallthru
          _
      $region52: #{tpu_custom_call.1} parent=5 // pred_fallthru
        _
    $region6: #{tpu_custom_call.1} parent=1 // loop_footer
      %s21 = sadd.s32 1, %s17
    $region7: #{tpu_custom_call.1} parent=1 // loop_footer_branch
      %16 = sbr.rel target = $region3
    $region8: #{tpu_custom_call.1} parent=1 // loop_exit
      _
    %1116 = vsyncpa [#allocation4], 1
    %s1117 = scalar_lea.sflag [#allocation4], 1
    %1118 = vsyncpa %s1117, 1
    %1119 = vsyncpa [#allocation7], 1
    %1120 = vsyncpa [#allocation5], 1
    %s1121 = scalar_lea.sflag [#allocation5], 1
    %1122 = vsyncpa %s1121, 1

</llo_original>
